<compile_context>
chip_gen: v6e
topology: v6e:2x2x1
jax: 0.10.0
libtpu: 0.0.40
codegen_flags: <defaults>
</compile_context>

<pallas_src>
import math

import jax
import jax.numpy as jnp
from jax.experimental import pallas as pl
from jax.experimental.pallas import tpu as pltpu


def _cdiv(a: int, b: int) -> int:
    return -(-a // b)


def _round_up(x: int, m: int) -> int:
    return _cdiv(x, m) * m


def _pick_tile(n_rows: int, d: int, itemsize: int, block_budget_bytes: int) -> int:
    """Largest sublane-aligned row tile whose block fits the per-buffer budget."""
    rows_by_vmem = max(8, (block_budget_bytes // max(1, d * itemsize)) // 8 * 8)
    return max(8, min(rows_by_vmem, _round_up(n_rows, 8)))


def _clamped_map(n_blocks: int):
    last = n_blocks - 1
    # Grid is (d_chunk_index j, row_step i); clamp i so overrun steps re-target
    # the last block (Pallas skips the DMA when the block index is unchanged).
    return lambda j, i: (jnp.minimum(i, last), j)


def _make_kernel(n_src, n_tgt, d_chunk, tile_src, tile_tgt, inv_d):
    n_full_src, rem_src = divmod(n_src, tile_src)
    n_full_tgt, rem_tgt = divmod(n_tgt, tile_tgt)
    inv_src = 1.0 / float(n_src)
    inv_tgt = 1.0 / float(n_tgt)

    def kernel(src_ref, tgt_ref, out_ref, src_acc, tgt_acc):
        i = pl.program_id(1)
        last_step = pl.num_programs(1) - 1

        @pl.when(i == 0)
        def _init():
            src_acc[...] = jnp.zeros_like(src_acc)
            tgt_acc[...] = jnp.zeros_like(tgt_acc)

        def fold(blk, tile):
            # Group rows into sublane-sized chunks; axis-0 sum is pure VPU adds.
            return jnp.sum(
                blk.astype(jnp.float32).reshape(tile // 8, 8, d_chunk), axis=0
            )  # (8, d_chunk)

        # ---- source: fast path for full blocks, masked path only for tail ----
        if n_full_src > 0:
            @pl.when(i < n_full_src)
            def _src_full():
                src_acc[...] += fold(src_ref[...], tile_src)

        if rem_src:  # static: emit masked path only if a tail block exists
            @pl.when(i == n_full_src)
            def _src_tail():
                rows = jax.lax.broadcasted_iota(jnp.int32, (tile_src, 1), 0)
                blk = src_ref[...]
                blk = jnp.where(rows < rem_src, blk, jnp.zeros_like(blk))
                src_acc[...] += fold(blk, tile_src)

        # ---- target ----
        if n_full_tgt > 0:
            @pl.when(i < n_full_tgt)
            def _tgt_full():
                tgt_acc[...] += fold(tgt_ref[...], tile_tgt)

        if rem_tgt:
            @pl.when(i == n_full_tgt)
            def _tgt_tail():
                rows = jax.lax.broadcasted_iota(jnp.int32, (tile_tgt, 1), 0)
                blk = tgt_ref[...]
                blk = jnp.where(rows < rem_tgt, blk, jnp.zeros_like(blk))
                tgt_acc[...] += fold(blk, tile_tgt)

        @pl.when(i == last_step)
        def _finalize():
            # Single XLU sublane reduce per input; 1/N and 1/D scaling once.
            src_mean = jnp.sum(src_acc[...], axis=0, keepdims=True) * inv_src
            tgt_mean = jnp.sum(tgt_acc[...], axis=0, keepdims=True) * inv_tgt
            diff = src_mean - tgt_mean
            out_ref[0, 0] = jnp.sum(diff * diff) * inv_d

    return kernel


def _device_kind() -> str:
    try:
        return jax.devices()[0].device_kind.lower()
    except Exception:
        return ""


def mmd_loss(source: jax.Array, target: jax.Array, *,
             block_budget_bytes: int = 4 * 1024 * 1024) -> jax.Array:
    assert source.shape[1:] == target.shape[1:], "feature dims must match"
    n_src = source.shape[0]
    n_tgt = target.shape[0]
    d = int(math.prod(source.shape[1:])) if source.ndim > 1 else 1

    src2d = source.reshape(n_src, d)
    tgt2d = target.reshape(n_tgt, d)

    kind = _device_kind()
    is_v7 = "v7" in kind
    # v7x has 64 MiB VMEM/TC -> cap scoped limit at 48 MiB; v5e/v6e have
    # 128 MiB physical but only a 16/32 MiB default scoped limit -> raise to 64.
    vmem_limit = (48 if is_v7 else 64) * 1024 * 1024

    # Shard the feature dim across the 2 TensorCores on v7x only; keep chunks
    # lane-aligned (multiples of 128). Single chunk elsewhere.
    n_chunks = 2 if (is_v7 and d % 256 == 0) else 1
    d_chunk = d // n_chunks

    itemsize = jnp.dtype(source.dtype).itemsize
    tile_src = _pick_tile(n_src, d_chunk, itemsize, block_budget_bytes)
    tile_tgt = _pick_tile(n_tgt, d_chunk, itemsize, block_budget_bytes)

    n_blk_src = _cdiv(n_src, tile_src)
    n_blk_tgt = _cdiv(n_tgt, tile_tgt)
    n_steps = max(n_blk_src, n_blk_tgt)

    cost = pl.CostEstimate(
        flops=(n_src + n_tgt) * d + 4 * d,
        transcendentals=0,
        bytes_accessed=(n_src + n_tgt) * d * itemsize + 4 * n_chunks,
    )

    out = pl.pallas_call(
        _make_kernel(n_src, n_tgt, d_chunk, tile_src, tile_tgt, 1.0 / float(d)),
        grid=(n_chunks, n_steps),
        in_specs=[
            pl.BlockSpec((tile_src, d_chunk), _clamped_map(n_blk_src)),
            pl.BlockSpec((tile_tgt, d_chunk), _clamped_map(n_blk_tgt)),
        ],
        out_specs=pl.BlockSpec(
            (1, 1), lambda j, i: (0, j), memory_space=pltpu.MemorySpace.SMEM
        ),
        out_shape=jax.ShapeDtypeStruct((1, n_chunks), jnp.float32),
        scratch_shapes=[
            pltpu.VMEM((8, d_chunk), jnp.float32),
            pltpu.VMEM((8, d_chunk), jnp.float32),
        ],
        compiler_params=pltpu.CompilerParams(
            dimension_semantics=("parallel", "arbitrary"),
            vmem_limit_bytes=vmem_limit,
        ),
        cost_estimate=cost,
    )(src2d, tgt2d)
    # Per-chunk partials are already scaled by 1/d; summing them gives the MSE.
    return jnp.sum(out)


if __name__ == "__main__":
    key = jax.random.PRNGKey(0)
    k_src, k_tgt = jax.random.split(key)

    # Small shapes consistent with the module: feature vectors per batch item.
    N_SRC, N_TGT, D = 8, 16, 128
    source = jax.random.normal(k_src, (N_SRC, D), dtype=jnp.float32)
    target = jax.random.normal(k_tgt, (N_TGT, D), dtype=jnp.float32)

    result = jax.block_until_ready(mmd_loss(source, target))
    ref = jnp.mean((jnp.mean(source, axis=0) - jnp.mean(target, axis=0)) ** 2)
    assert jnp.allclose(result, ref, rtol=1e-5, atol=1e-6), (result, ref)

    # Multi-step pipelined path: asymmetric batches, tail blocks (non-multiple
    # of the tile), and overrun grid steps for the shorter input.
    k2, k3 = jax.random.split(k_tgt)
    src2 = jax.random.normal(k2, (37, 256), dtype=jnp.float32)
    tgt2 = jax.random.normal(k3, (19, 256), dtype=jnp.float32)
    res2 = jax.block_until_ready(mmd_loss(src2, tgt2, block_budget_bytes=16 * 1024))
    ref2 = jnp.mean((jnp.mean(src2, axis=0) - jnp.mean(tgt2, axis=0)) ** 2)
    assert jnp.allclose(res2, ref2, rtol=1e-5, atol=1e-6), (res2, ref2)

    print("KERNEL_OK")
</pallas_src>

<mosaic_0001>
module attributes {stable_mosaic.version = 11 : i64} {
  func.func @kernel(%arg0: i32, %arg1: i32, %arg2: memref<8x128xf32, #tpu.memory_space<vmem>>, %arg3: memref<16x128xf32, #tpu.memory_space<vmem>>, %arg4: memref<1x1xf32, #tpu.memory_space<smem>>, %arg5: memref<8x128xf32, #tpu.memory_space<vmem>>, %arg6: memref<8x128xf32, #tpu.memory_space<vmem>>) attributes {dimension_semantics = [#tpu.dimension_semantics<parallel>, #tpu.dimension_semantics<arbitrary>], iteration_bounds = array<i64: 1, 1>, scalar_prefetch = 0 : i64, scratch_operands = 2 : i64, tpu.core_type = #tpu.core_type<tc>, window_params = [{transform_indices = @transform_0, window_bounds = array<i64: 8, 128>}, {transform_indices = @transform_1, window_bounds = array<i64: 16, 128>}, {transform_indices = @transform_2, window_bounds = array<i64: 1, 1>}]} {
    %c0_i32 = arith.constant 0 : i32
    %0 = arith.cmpi eq, %arg1, %c0_i32 : i32
    %1 = arith.extui %0 : i1 to i32
    %c0_i32_0 = arith.constant 0 : i32
    %2 = arith.cmpi ne, %1, %c0_i32_0 : i32
    scf.if %2 {
      %cst = arith.constant 0.000000e+00 : f32
      %12 = vector.broadcast %cst : f32 to vector<8x128xf32>
      %c0 = arith.constant 0 : index
      %c0_6 = arith.constant 0 : index
      %13 = vector.load %arg5[%c0, %c0_6] : memref<8x128xf32, #tpu.memory_space<vmem>>, vector<8x128xf32>
      tpu.vector_store %arg5[%c0, %c0_6], %12 {strides = array<i32>} : memref<8x128xf32, #tpu.memory_space<vmem>>, vector<8x128xf32>,
      %cst_7 = arith.constant 0.000000e+00 : f32
      %14 = vector.broadcast %cst_7 : f32 to vector<8x128xf32>
      %c0_8 = arith.constant 0 : index
      %c0_9 = arith.constant 0 : index
      %15 = vector.load %arg6[%c0_8, %c0_9] : memref<8x128xf32, #tpu.memory_space<vmem>>, vector<8x128xf32>
      tpu.vector_store %arg6[%c0_8, %c0_9], %14 {strides = array<i32>} : memref<8x128xf32, #tpu.memory_space<vmem>>, vector<8x128xf32>,
    } else {
    }
    %c1_i32 = arith.constant 1 : i32
    %3 = arith.cmpi slt, %arg1, %c1_i32 : i32
    %4 = arith.extui %3 : i1 to i32
    %c0_i32_1 = arith.constant 0 : i32
    %5 = arith.cmpi ne, %4, %c0_i32_1 : i32
    scf.if %5 {
      %c0 = arith.constant 0 : index
      %c0_6 = arith.constant 0 : index
      %12 = vector.load %arg5[%c0, %c0_6] : memref<8x128xf32, #tpu.memory_space<vmem>>, vector<8x128xf32>
      %c0_7 = arith.constant 0 : index
      %c0_8 = arith.constant 0 : index
      %13 = vector.load %arg2[%c0_7, %c0_8] : memref<8x128xf32, #tpu.memory_space<vmem>>, vector<8x128xf32>
      %14 = vector.shape_cast %13 : vector<8x128xf32> to vector<1x8x128xf32>
      %cst = arith.constant dense<0.000000e+00> : vector<8x128xf32>
      %15 = vector.multi_reduction <add>, %14, %cst [0] : vector<1x8x128xf32> to vector<8x128xf32>
      %16 = arith.addf %12, %15 : vector<8x128xf32>
      %c0_9 = arith.constant 0 : index
      %c0_10 = arith.constant 0 : index
      %17 = vector.load %arg5[%c0_9, %c0_10] : memref<8x128xf32, #tpu.memory_space<vmem>>, vector<8x128xf32>
      tpu.vector_store %arg5[%c0_9, %c0_10], %16 {strides = array<i32>} : memref<8x128xf32, #tpu.memory_space<vmem>>, vector<8x128xf32>,
    } else {
    }
    %c1_i32_2 = arith.constant 1 : i32
    %6 = arith.cmpi slt, %arg1, %c1_i32_2 : i32
    %7 = arith.extui %6 : i1 to i32
    %c0_i32_3 = arith.constant 0 : i32
    %8 = arith.cmpi ne, %7, %c0_i32_3 : i32
    scf.if %8 {
      %c0 = arith.constant 0 : index
      %c0_6 = arith.constant 0 : index
      %12 = vector.load %arg6[%c0, %c0_6] : memref<8x128xf32, #tpu.memory_space<vmem>>, vector<8x128xf32>
      %c0_7 = arith.constant 0 : index
      %c0_8 = arith.constant 0 : index
      %13 = vector.load %arg3[%c0_7, %c0_8] : memref<16x128xf32, #tpu.memory_space<vmem>>, vector<16x128xf32>
      %14 = vector.shape_cast %13 : vector<16x128xf32> to vector<2x8x128xf32>
      %cst = arith.constant dense<0.000000e+00> : vector<8x128xf32>
      %15 = vector.multi_reduction <add>, %14, %cst [0] : vector<2x8x128xf32> to vector<8x128xf32>
      %16 = arith.addf %12, %15 : vector<8x128xf32>
      %c0_9 = arith.constant 0 : index
      %c0_10 = arith.constant 0 : index
      %17 = vector.load %arg6[%c0_9, %c0_10] : memref<8x128xf32, #tpu.memory_space<vmem>>, vector<8x128xf32>
      tpu.vector_store %arg6[%c0_9, %c0_10], %16 {strides = array<i32>} : memref<8x128xf32, #tpu.memory_space<vmem>>, vector<8x128xf32>,
    } else {
    }
    %c0_i32_4 = arith.constant 0 : i32
    %9 = arith.cmpi eq, %arg1, %c0_i32_4 : i32
    %10 = arith.extui %9 : i1 to i32
    %c0_i32_5 = arith.constant 0 : i32
    %11 = arith.cmpi ne, %10, %c0_i32_5 : i32
    scf.if %11 {
      %c0 = arith.constant 0 : index
      %c0_6 = arith.constant 0 : index
      %12 = vector.load %arg5[%c0, %c0_6] : memref<8x128xf32, #tpu.memory_space<vmem>>, vector<8x128xf32>
      %cst = arith.constant dense<0.000000e+00> : vector<128xf32>
      %13 = vector.multi_reduction <add>, %12, %cst [0] : vector<8x128xf32> to vector<128xf32>
      %14 = vector.shape_cast %13 : vector<128xf32> to vector<1x128xf32>
      %cst_7 = arith.constant 1.250000e-01 : f32
      %15 = vector.broadcast %cst_7 : f32 to vector<1x128xf32>
      %16 = arith.mulf %14, %15 : vector<1x128xf32>
      %c0_8 = arith.constant 0 : index
      %c0_9 = arith.constant 0 : index
      %17 = vector.load %arg6[%c0_8, %c0_9] : memref<8x128xf32, #tpu.memory_space<vmem>>, vector<8x128xf32>
      %cst_10 = arith.constant dense<0.000000e+00> : vector<128xf32>
      %18 = vector.multi_reduction <add>, %17, %cst_10 [0] : vector<8x128xf32> to vector<128xf32>
      %19 = vector.shape_cast %18 : vector<128xf32> to vector<1x128xf32>
      %cst_11 = arith.constant 6.250000e-02 : f32
      %20 = vector.broadcast %cst_11 : f32 to vector<1x128xf32>
      %21 = arith.mulf %19, %20 : vector<1x128xf32>
      %22 = arith.subf %16, %21 : vector<1x128xf32>
      %23 = arith.mulf %22, %22 : vector<1x128xf32>
      %24 = vector.shape_cast %23 : vector<1x128xf32> to vector<1x1x128xf32>
      %cst_12 = arith.constant dense<0.000000e+00> : vector<1xf32>
      %25 = vector.multi_reduction <add>, %24, %cst_12 [1, 2] : vector<1x1x128xf32> to vector<1xf32>
      %26 = vector.shape_cast %25 : vector<1xf32> to vector<1x1x1xf32>
      %27 = vector.extract %26[0, 0, 0] : f32 from vector<1x1x1xf32>
      %cst_13 = arith.constant 7.812500e-03 : f32
      %28 = arith.mulf %27, %cst_13 : f32
      %c0_14 = arith.constant 0 : index
      %c0_15 = arith.constant 0 : index
      %29 = memref.load %arg4[%c0_14, %c0_15] : memref<1x1xf32, #tpu.memory_space<smem>>
      memref.store %28, %arg4[%c0_14, %c0_15] : memref<1x1xf32, #tpu.memory_space<smem>>
    } else {
    }
    return
  }
  func.func @transform_0(%arg0: i32, %arg1: i32) -> (i32, i32) {
    %c0_i32 = arith.constant 0 : i32
    %0 = arith.minsi %arg1, %c0_i32 : i32
    %c0_i32_0 = arith.constant 0 : i32
    return %0, %arg0 : i32, i32
  }
  func.func @transform_1(%arg0: i32, %arg1: i32) -> (i32, i32) {
    %c0_i32 = arith.constant 0 : i32
    %0 = arith.minsi %arg1, %c0_i32 : i32
    %c0_i32_0 = arith.constant 0 : i32
    return %0, %arg0 : i32, i32
  }
  func.func @transform_2(%arg0: i32, %arg1: i32) -> (i32, i32) {
    %c0_i32 = arith.constant 0 : i32
    %c0_i32_0 = arith.constant 0 : i32
    return %c0_i32, %arg0 : i32, i32
  }
}

</mosaic_0001>

<llo_original>
// kernel: tpu_custom_call.1
$region0: #{tpu_custom_call.1}
  #allocation0 [shape = 'u32[]', space=smem, size = 0x4, offset = 0x4, fixed_abs, tag = 'smem constant byte address 0x4 - core index']
  #allocation1 [shape = 'u32[144,128]{1,0:T(1,128)}', space=vmem, size = 0x12000, scoped, tag = 'internal scratch']
  #allocation2 [shape = 'f32[8,128]{1,0:T(8,128)}', space=vmem, size = 0x1000, scoped, tag = 'scratch operand']
  #allocation3 [shape = 'f32[8,128]{1,0:T(8,128)}', space=vmem, size = 0x1000, scoped, tag = 'scratch operand']
  %s0 = inlined_call_operand.hbm [shape: f32[8,128], index: 0, kind: input, shape index: {}]
  %s1 = inlined_call_operand.hbm [shape: f32[16,128], index: 1, kind: input, shape index: {}]
  %s2 = inlined_call_operand.hbm [shape: f32[1,1], index: 2, kind: output, shape index: {}]
  %s3 = sld [smem:[#allocation0]]
  $region38: #{tpu_custom_call.1} parent=0
    _
  %s5 = ssub.s32 1, %s3
  %s6 = scalar_select 0, %s5, %s3
  $region1: #{tpu_custom_call.1} parent=0
    #allocation4 [shape = 'u8[4096]{0}', space=vmem, size = 0x1000, scoped, tag = 'input window, operand 0, single buffered']
    #allocation5 [shape = 's32[1]{0}', space=sflag, size = 0x4, scoped, tag = 'scoped memory for tpu_custom_call.1']
    #allocation6 [shape = 's32[1]{0}', space=sflag, size = 0x4, scoped, tag = 'scoped memory for tpu_custom_call.1']
    #allocation7 [shape = 'u8[8192]{0}', space=vmem, size = 0x2000, scoped, tag = 'input window, operand 1, single buffered']
    #allocation8 [shape = 's32[1]{0}', space=sflag, size = 0x4, scoped, tag = 'scoped memory for tpu_custom_call.1']
    #allocation9 [shape = 'u8[512]{0}', space=smem, size = 0x200, scoped, tag = 'output window, operand 0, single buffered']
    %7 = vsyncpa [#allocation5], 0
    %8 = vsyncpa [#allocation8], 0
    %9 = vsyncpa [#allocation6], 0
    // Predicated region
    $region2: #{tpu_custom_call.1} parent=1 // pred_check
      _
    $region3: #{tpu_custom_call.1} parent=1 // pred_check_branch
      %11 = sbr.rel (0) target = $region5
    $region4: #{tpu_custom_call.1} parent=1 // pred_region
      %s13 = ssub.s32 128, 128
      %14 = vsyncadd [#allocation5], %s13
      %s16 = sshll.u32 [#allocation4], 4
      %s17 = int_to_ptr.vmem [resolvable:$true] %s16
      %19 = dma.hbm_to_vmem [thread:$0]  %s0, 128, %s17, [#allocation5]
    $region5: #{tpu_custom_call.1} parent=1 // pred_fallthru
      _
    // Predicated region
    $region6: #{tpu_custom_call.1} parent=1 // pred_check
      _
    $region7: #{tpu_custom_call.1} parent=1 // pred_check_branch
      %21 = sbr.rel (0) target = $region9
    $region8: #{tpu_custom_call.1} parent=1 // pred_region
      %s23 = ssub.s32 256, 256
      %24 = vsyncadd [#allocation8], %s23
      %s25 = sshll.u32 [#allocation7], 4
      %s26 = int_to_ptr.vmem [resolvable:$true] %s25
      %31 = dma.hbm_to_vmem [thread:$0]  %s1, 256, %s26, [#allocation8], 128, 128, 8
    $region9: #{tpu_custom_call.1} parent=1 // pred_fallthru
      _
    // Predicated region
    $region10: #{tpu_custom_call.1} parent=1 // pred_check
      _
    $region11: #{tpu_custom_call.1} parent=1 // pred_check_branch
      %33 = sbr.rel (0) target = $region13
    $region12: #{tpu_custom_call.1} parent=1 // pred_region
      %34 = dma.done [#allocation5], 128
    $region13: #{tpu_custom_call.1} parent=1 // pred_fallthru
      _
    // Predicated region
    $region14: #{tpu_custom_call.1} parent=1 // pred_check
      _
    $region15: #{tpu_custom_call.1} parent=1 // pred_check_branch
      %36 = sbr.rel (0) target = $region17
    $region16: #{tpu_custom_call.1} parent=1 // pred_region
      %37 = dma.done [#allocation8], 256
    $region17: #{tpu_custom_call.1} parent=1 // pred_fallthru
      _
    %p38 = scmp.eq.s32.totalorder 0, 0
    // Predicated region
    $region18: #{tpu_custom_call.1} parent=1 // pred_check
      %p39 = pneg %p38
    $region19: #{tpu_custom_call.1} parent=1 // pred_check_branch
      %41 = sbr.rel (%p39) target = $region21
    $region20: #{tpu_custom_call.1} parent=1 // pred_region
      %42 = vst [vmem:[#allocation2] sm:$0xff] 0.0
      %43 = vst [vmem:[#allocation3] sm:$0xff] 0.0
    $region21: #{tpu_custom_call.1} parent=1 // pred_fallthru
      _
    %p44 = scmp.lt.s32.totalorder 0, 1
    // Predicated region
    $region22: #{tpu_custom_call.1} parent=1 // pred_check
      %p45 = pneg %p44
    $region23: #{tpu_custom_call.1} parent=1 // pred_check_branch
      %47 = sbr.rel (%p45) target = $region25
    $region24: #{tpu_custom_call.1} parent=1 // pred_region
      %v48 = vld [vmem:[#allocation2] sm:$0xff]
      %v49 = vld [vmem:[#allocation4] sm:$0xff]
      %v50 = vadd.f32 %v49, 0.0
      %v51 = vadd.f32 %v48, %v50
      %52 = vst [vmem:[#allocation2] sm:$0xff] %v51
      %v53 = vld [vmem:[#allocation3] sm:$0xff]
      %v54 = vld [vmem:[#allocation7] sm:$0xff]
      %v55 = vld [vmem:[#allocation7 + $0x8] sm:$0xff]
      %v56 = vadd.f32 %v54, %v55
      %v57 = vadd.f32 %v53, %v56
      %58 = vst [vmem:[#allocation3] sm:$0xff] %v57
    $region25: #{tpu_custom_call.1} parent=1 // pred_fallthru
      _
    // Predicated region
    $region26: #{tpu_custom_call.1} parent=1 // pred_check
      %p59 = pneg %p38
    $region27: #{tpu_custom_call.1} parent=1 // pred_check_branch
      %61 = sbr.rel (%p59) target = $region29
    $region28: #{tpu_custom_call.1} parent=1 // pred_region
      %v62 = vld [vmem:[#allocation2] sm:$0xff]
      %v63 = vrot.slane %v62, 4
      %v64 = vadd.f32 %v62, %v63
      %v65 = vrot.slane %v64, 2
      %v66 = vadd.f32 %v64, %v65
      %v67 = vrot.slane %v66, 1
      %v68 = vadd.f32 %v66, %v67
      %v69 = vmul.f32 %v68, 0.125
      %v70 = vld [vmem:[#allocation3] sm:$0xff]
      %v71 = vrot.slane %v70, 4
      %v72 = vadd.f32 %v70, %v71
      %v73 = vrot.slane %v72, 2
      %v74 = vadd.f32 %v72, %v73
      %v75 = vrot.slane %v74, 1
      %v76 = vadd.f32 %v74, %v75
      %v77 = vmul.f32 %v76, 0.0625
      %v78 = vsub.f32 %v69, %v77
      %v79 = vmul.f32 %v78, %v78
      %vm80 = vcmask 1040384
      %v81 = vsel %vm80, %v79, 0.0
      %82 = vadd.xlane.f32.xlu0 %v81
      %v83 = vpop.xlane.xlu0 %82
      %v84 = vrot.slane %v83, 4
      %v85 = vadd.f32 %v83, %v84
      %v86 = vrot.slane %v85, 2
      %v87 = vadd.f32 %v85, %v86
      %v88 = vrot.slane %v87, 1
      %v89 = vadd.f32 %v87, %v88
      %s90 = vtos %v89
      %s91 = smul.f32 %s90, 0.0078125
      %s92 = scalar_lea.smem [#allocation9], 0
      %93 = sst [smem:[%s92]] %s91
    $region29: #{tpu_custom_call.1} parent=1 // pred_fallthru
      _
    // Predicated region
    $region30: #{tpu_custom_call.1} parent=1 // pred_check
      _
    $region31: #{tpu_custom_call.1} parent=1 // pred_check_branch
      %95 = sbr.rel (0) target = $region33
    $region32: #{tpu_custom_call.1} parent=1 // pred_region
      %s97 = ssub.s32 16, 16
      %98 = vsyncadd [#allocation6], %s97
      %101 = dma.smem_to_hbm [#allocation9], 16, %s2, [#allocation6]
    $region33: #{tpu_custom_call.1} parent=1 // pred_fallthru
      _
    // Predicated region
    $region34: #{tpu_custom_call.1} parent=1 // pred_check
      _
    $region35: #{tpu_custom_call.1} parent=1 // pred_check_branch
      %103 = sbr.rel (0) target = $region37
    $region36: #{tpu_custom_call.1} parent=1 // pred_region
      %104 = dma.done [#allocation6], 16
    $region37: #{tpu_custom_call.1} parent=1 // pred_fallthru
      _
    %105 = sfence
    %106 = vsyncpa [#allocation5], 1
    %107 = vsyncpa [#allocation8], 1
    %108 = vsyncpa [#allocation6], 1

</llo_original>
